<compile_context>
chip_gen: v6e
topology: v6e:2x2x1
jax: 0.10.0
libtpu: 0.0.40
codegen_flags: <defaults>
</compile_context>

<pallas_src>
import jax
import jax.numpy as jnp
from jax.experimental import pallas as pl
from jax.experimental.pallas import tpu as pltpu

_LANE = 128
_BYPASS_ELEMS = 1 << 20          # below this, fused XLA beats pallas dispatch
_COL_CANDIDATES = (2048, 1024, 512, 256, 128)


def _beta_math(x, out_dtype):
    # 0.5 ** (x - 1) == 2 ** (1 - x); exact for integer-valued x.
    return jnp.exp2(1.0 - x.astype(jnp.float32)).astype(out_dtype)


def _beta_kernel(i_ref, o_ref):
    x = i_ref[...].astype(jnp.float32)
    o_ref[...] = jnp.exp2(1.0 - x).astype(o_ref.dtype)


def _tile_config():
    """(preferred_cols, max_rows, vmem_limit_bytes, megacore_split)."""
    kind = ""
    try:
        kind = jax.devices()[0].device_kind.lower()
    except Exception:
        pass
    modern = any(t in kind for t in ("v6", "v7", "tpu7"))
    if modern:
        # 2048 x 1024 f32 block = 8 MiB; (in + out) double-buffered = 32 MiB.
        megacore = ("v7" in kind) or ("tpu7" in kind)   # 2 TensorCores per chip
        return 1024, 2048, 48 * 1024 * 1024, megacore
    # v5e / unknown: 1024 x 512 f32 block = 2 MiB; 8 MiB total footprint fits
    # the 16 MiB scoped-VMEM default without touching compiler params.
    return 512, 1024, None, False


def beta_forward(i, *, force_kernel=False):
    """Elementwise 0.5 ** (i - 1)."""
    i = jnp.asarray(i)
    orig_shape = i.shape
    in_dtype = i.dtype
    # Match PyTorch: float input stays float, integer input promotes to f32.
    out_dtype = in_dtype if jnp.issubdtype(in_dtype, jnp.floating) else jnp.float32

    n = i.size
    if n == 0:
        return jnp.zeros(orig_shape, out_dtype)

    if (n < _BYPASS_ELEMS) and not force_kernel:
        # Real DAgger `i` tensors are tiny; a single fused pass is strictly faster.
        return _beta_math(i, out_dtype)

    preferred_cols, max_rows, vmem_limit, megacore = _tile_config()

    # Pick the widest lane-dense column width that divides n -> zero-copy path.
    cols = None
    for c in _COL_CANDIDATES:
        if n % c == 0:
            cols = c
            break

    flat = i.reshape(-1)
    if cols is None:
        cols = preferred_cols
        rows = pl.cdiv(n, cols)
        pad = rows * cols - n
        # Pad with 1s (beta(1) = 1): benign values in the padded tail.
        flat = jnp.pad(flat, (0, pad), constant_values=1)
        padded = True
    else:
        rows = n // cols
        padded = False
    x2d = flat.reshape(rows, cols)

    # Constant per-block element budget regardless of the chosen column width.
    block_elems = max_rows * preferred_cols
    max_tile_rows = max(8, (block_elems // cols) // 8 * 8)

    if rows > max_tile_rows:
        tile_rows = max_tile_rows                      # multiple of 8
    elif megacore and rows >= 16:
        # Split into >= 2 steps so "parallel" shards rows across both TCs.
        tile_rows = ((pl.cdiv(rows, 2) + 7) // 8) * 8  # multiple of 8, <= rows
    else:
        tile_rows = rows                               # single full-extent block

    grid = (pl.cdiv(rows, tile_rows),)

    total = rows * cols
    cost = pl.CostEstimate(
        flops=2 * total,                                # subtract + cast
        transcendentals=total,                          # exp2 per element
        bytes_accessed=total * (jnp.dtype(in_dtype).itemsize
                                + jnp.dtype(out_dtype).itemsize),
    )

    cp_kwargs = dict(dimension_semantics=("parallel",))
    if vmem_limit is not None:
        cp_kwargs["vmem_limit_bytes"] = vmem_limit

    out2d = pl.pallas_call(
        _beta_kernel,
        out_shape=jax.ShapeDtypeStruct((rows, cols), out_dtype),
        grid=grid,
        in_specs=[pl.BlockSpec((tile_rows, cols), lambda r: (r, 0))],
        out_specs=pl.BlockSpec((tile_rows, cols), lambda r: (r, 0)),
        compiler_params=pltpu.CompilerParams(**cp_kwargs),
        cost_estimate=cost,
    )(x2d)

    if padded:
        return out2d.reshape(-1)[:n].reshape(orig_shape)
    return out2d.reshape(orig_shape)


if __name__ == "__main__":
    key = jax.random.PRNGKey(0)
    # `i` is an iteration-index / schedule tensor; small positive values.
    shape = (2, 4, 16, 16)
    i = jax.random.randint(key, shape, minval=1, maxval=10).astype(jnp.float32)

    # Fast path real DAgger sizes hit (fused XLA, no pallas dispatch).
    out_fast = beta_forward(i)
    # Force the Pallas kernel path on the same input (aligned, zero-copy wrapper).
    out_kernel = beta_forward(i, force_kernel=True)

    # Also exercise the unaligned (padded + sliced) kernel path.
    j = jax.random.randint(jax.random.PRNGKey(1), (3, 5, 7), 1, 10).astype(jnp.float32)
    out_unaligned = beta_forward(j, force_kernel=True)

    jax.block_until_ready((out_fast, out_kernel, out_unaligned))

    ref_i = jnp.power(jnp.float32(0.5), i - 1.0)
    ref_j = jnp.power(jnp.float32(0.5), j - 1.0)
    assert out_fast.shape == i.shape and out_fast.dtype == i.dtype
    assert out_kernel.shape == i.shape and out_kernel.dtype == i.dtype
    assert out_unaligned.shape == j.shape and out_unaligned.dtype == j.dtype
    assert jnp.allclose(out_fast, ref_i, rtol=1e-6, atol=0.0), "bypass mismatch"
    assert jnp.allclose(out_kernel, ref_i, rtol=1e-6, atol=0.0), "kernel mismatch"
    assert jnp.allclose(out_unaligned, ref_j, rtol=1e-6, atol=0.0), "ragged mismatch"

    print("KERNEL_OK")
</pallas_src>

<mosaic_0001>
module attributes {stable_mosaic.version = 11 : i64} {
  func.func @_beta_kernel(%arg0: i32, %arg1: memref<1x2048xf32, #tpu.memory_space<vmem>>, %arg2: memref<1x2048xf32, #tpu.memory_space<vmem>>) attributes {dimension_semantics = [#tpu.dimension_semantics<parallel>], iteration_bounds = array<i64: 1>, scalar_prefetch = 0 : i64, scratch_operands = 0 : i64, tpu.core_type = #tpu.core_type<tc>, window_params = [{transform_indices = @transform_0, window_bounds = array<i64: 1, 2048>}, {transform_indices = @transform_1, window_bounds = array<i64: 1, 2048>}]} {
    %c0 = arith.constant 0 : index
    %c0_0 = arith.constant 0 : index
    %0 = vector.load %arg1[%c0, %c0_0] : memref<1x2048xf32, #tpu.memory_space<vmem>>, vector<1x2048xf32>
    %cst = arith.constant 1.000000e+00 : f32
    %1 = vector.broadcast %cst : f32 to vector<1x2048xf32>
    %2 = arith.subf %1, %0 : vector<1x2048xf32>
    %3 = math.exp2 %2 : vector<1x2048xf32>
    %c0_1 = arith.constant 0 : index
    %c0_2 = arith.constant 0 : index
    %4 = vector.load %arg2[%c0_1, %c0_2] : memref<1x2048xf32, #tpu.memory_space<vmem>>, vector<1x2048xf32>
    tpu.vector_store %arg2[%c0_1, %c0_2], %3 {strides = array<i32>} : memref<1x2048xf32, #tpu.memory_space<vmem>>, vector<1x2048xf32>,
    return
  }
  func.func @transform_0(%arg0: i32) -> (i32, i32) {
    %c0_i32 = arith.constant 0 : i32
    %c0_i32_0 = arith.constant 0 : i32
    return %arg0, %c0_i32 : i32, i32
  }
  func.func @transform_1(%arg0: i32) -> (i32, i32) {
    %c0_i32 = arith.constant 0 : i32
    %c0_i32_0 = arith.constant 0 : i32
    return %arg0, %c0_i32 : i32, i32
  }
}

</mosaic_0001>

<llo_original>
// kernel: tpu_custom_call.1
$region0: #{tpu_custom_call.1}
  #allocation0 [shape = 'u32[]', space=smem, size = 0x4, offset = 0x4, fixed_abs, tag = 'smem constant byte address 0x4 - core index']
  #allocation1 [shape = 'u32[144,128]{1,0:T(1,128)}', space=vmem, size = 0x12000, scoped, tag = 'internal scratch']
  %s0 = inlined_call_operand.hbm [shape: f32[1,2048], index: 0, kind: input, shape index: {}]
  %s1 = inlined_call_operand.hbm [shape: f32[1,2048], index: 1, kind: output, shape index: {}]
  %s2 = sld [smem:[#allocation0]]
  $region18: #{tpu_custom_call.1} parent=0
    _
  %s4 = ssub.s32 1, %s2
  %s5 = scalar_select 0, %s4, %s2
  $region1: #{tpu_custom_call.1} parent=0
    #allocation2 [shape = 'u8[8192]{0}', space=vmem, size = 0x2000, scoped, tag = 'input window, operand 0, single buffered']
    #allocation3 [shape = 's32[1]{0}', space=sflag, size = 0x4, scoped, tag = 'scoped memory for tpu_custom_call.1']
    #allocation4 [shape = 's32[1]{0}', space=sflag, size = 0x4, scoped, tag = 'scoped memory for tpu_custom_call.1']
    #allocation5 [shape = 'u8[8192]{0}', space=vmem, size = 0x2000, scoped, tag = 'output window, operand 0, single buffered']
    %6 = vsyncpa [#allocation3], 0
    %7 = vsyncpa [#allocation4], 0
    // Predicated region
    $region2: #{tpu_custom_call.1} parent=1 // pred_check
      _
    $region3: #{tpu_custom_call.1} parent=1 // pred_check_branch
      %9 = sbr.rel (0) target = $region5
    $region4: #{tpu_custom_call.1} parent=1 // pred_region
      %s11 = ssub.s32 256, 256
      %12 = vsyncadd [#allocation3], %s11
      %s14 = sshll.u32 [#allocation2], 4
      %s15 = int_to_ptr.vmem [resolvable:$true] %s14
      %17 = dma.hbm_to_vmem [thread:$0]  %s0, 256, %s15, [#allocation3]
    $region5: #{tpu_custom_call.1} parent=1 // pred_fallthru
      _
    // Predicated region
    $region6: #{tpu_custom_call.1} parent=1 // pred_check
      _
    $region7: #{tpu_custom_call.1} parent=1 // pred_check_branch
      %19 = sbr.rel (0) target = $region9
    $region8: #{tpu_custom_call.1} parent=1 // pred_region
      %20 = dma.done [#allocation3], 256
    $region9: #{tpu_custom_call.1} parent=1 // pred_fallthru
      _
    %v21 = vld [vmem:[#allocation2] sm:$0xff]
    %v22 = vld [vmem:[#allocation2 + $0x8] sm:$0xff]
    %v23 = vsub.f32 1.0, %v21
    %v24 = vsub.f32 1.0, %v22
    %v25 = vpow.pop %v23
    %v26 = vpow.pop %v24
    %27 = vst [vmem:[#allocation5] sm:$0xff] %v25
    %28 = vst [vmem:[#allocation5 + $0x8] sm:$0xff] %v26
    // Predicated region
    $region10: #{tpu_custom_call.1} parent=1 // pred_check
      _
    $region11: #{tpu_custom_call.1} parent=1 // pred_check_branch
      %30 = sbr.rel (0) target = $region13
    $region12: #{tpu_custom_call.1} parent=1 // pred_region
      %s32 = ssub.s32 256, 256
      %33 = vsyncadd [#allocation4], %s32
      %s35 = sshll.u32 [#allocation5], 4
      %s36 = int_to_ptr.vmem [resolvable:$true] %s35
      %38 = dma.vmem_to_hbm [thread:$0]  %s36, 256, %s1, [#allocation4]
    $region13: #{tpu_custom_call.1} parent=1 // pred_fallthru
      _
    // Predicated region
    $region14: #{tpu_custom_call.1} parent=1 // pred_check
      _
    $region15: #{tpu_custom_call.1} parent=1 // pred_check_branch
      %40 = sbr.rel (0) target = $region17
    $region16: #{tpu_custom_call.1} parent=1 // pred_region
      %41 = dma.done [#allocation4], 256
    $region17: #{tpu_custom_call.1} parent=1 // pred_fallthru
      _
    %42 = vsyncpa [#allocation3], 1
    %43 = vsyncpa [#allocation4], 1

</llo_original>
